<compile_context>
chip_gen: v7x
topology: tpu7x:2x2x1
jax: 0.10.0
libtpu: 0.0.40
codegen_flags: <defaults>
</compile_context>

<pallas_src>
import jax
import jax.numpy as jnp
from jax.experimental import pallas as pl
from jax.experimental.pallas import tpu as pltpu


# ---------------------------------------------------------------------------
# Fused projection + flash attention kernel.
# grid = (B, Sq tiles, Sk tiles); online-softmax accumulators in VMEM scratch.
# ---------------------------------------------------------------------------
def _fused_cross_attn_kernel(qin_ref, kin_ref, xin_ref, mask_ref,
                             wq_ref, wk_ref, wv_ref, o_ref,
                             q_sc, m_sc, l_sc, acc_sc):
    ki = pl.program_id(2)

    @pl.when(ki == 0)
    def _():
        # Project Q once per (b, qi) tile and cache it in VMEM (bf16).
        q_sc[...] = jnp.dot(
            qin_ref[0], wq_ref[...], preferred_element_type=jnp.float32
        ).astype(jnp.bfloat16)
        m_sc[...] = jnp.full_like(m_sc, -jnp.inf)
        l_sc[...] = jnp.zeros_like(l_sc)
        acc_sc[...] = jnp.zeros_like(acc_sc)

    # Project K / V for this Sk tile inline (no HBM round-trip of projections).
    k = jnp.dot(kin_ref[0], wk_ref[...],
                preferred_element_type=jnp.float32).astype(jnp.bfloat16)  # (tk, D)
    v = jnp.dot(xin_ref[0], wv_ref[...],
                preferred_element_type=jnp.float32).astype(jnp.bfloat16)  # (tk, D)

    keep = mask_ref[0] != 0  # (tq, tk) bool, from int8 mask

    # scores = q @ k^T with no in-kernel transpose: contract last dims.
    s = jax.lax.dot_general(
        q_sc[...], k, (((1,), (1,)), ((), ())),
        preferred_element_type=jnp.float32)                  # (tq, tk) f32

    # masked_fill intent: where tgt_mask == 0 -> -1e9 (no 1/sqrt(d_k) scaling,
    # matching the source module).
    s = jnp.where(keep, s, jnp.float32(-1e9))

    # Online (flash) softmax update.
    m_prev = m_sc[...]
    m_new = jnp.maximum(m_prev, jnp.max(s, axis=-1, keepdims=True))
    alpha = jnp.exp(m_prev - m_new)
    p = jnp.exp(s - m_new)                                   # (tq, tk) f32
    l_sc[...] = alpha * l_sc[...] + jnp.sum(p, axis=-1, keepdims=True)
    acc_sc[...] = alpha * acc_sc[...] + jnp.dot(
        p.astype(jnp.bfloat16), v, preferred_element_type=jnp.float32)
    m_sc[...] = m_new

    # dropout: eval-mode identity.

    @pl.when(ki == pl.num_programs(2) - 1)
    def _():
        inv_l = pl.reciprocal(l_sc[...], approx=True)        # EUP slot, ~free
        o_ref[0] = (acc_sc[...] * inv_l).astype(o_ref.dtype)


def cross_attention(q_in, k_in, x, wq, wk, wv, tgt_mask):
    """q_in/k_in: enc_output['q']/['k'] (B, Sq/Sk, D); x feeds V (B, Sk, D);
    w*: (D, D) PyTorch Linear weights (out, in); tgt_mask: (B, Sq, Sk),
    nonzero = keep."""
    B, Sq, D = q_in.shape
    Sk = k_in.shape[1]

    # Host-side weight transpose (free) + bf16 cast for MXU-native matmuls.
    wq_t = wq.T.astype(jnp.bfloat16)
    wk_t = wk.T.astype(jnp.bfloat16)
    wv_t = wv.T.astype(jnp.bfloat16)

    # bf16 activations; f32 accumulation happens inside the kernel.
    q_bf = q_in.astype(jnp.bfloat16)
    k_bf = k_in.astype(jnp.bfloat16)
    x_bf = x.astype(jnp.bfloat16)

    # int8 mask: 4x less HBM traffic than f32, no float-equality fragility.
    mask_i8 = (tgt_mask != 0).astype(jnp.int8)

    # Tile sizes: full sequence at toy shapes, 128 at scale (VMEM per step is
    # a few hundred KiB -> safe on v7x's 64 MiB as well as v5e/v6e).
    tq = Sq if Sq <= 128 else 128
    tk = Sk if Sk <= 128 else 128
    assert Sq % tq == 0 and Sk % tk == 0

    grid = (B, Sq // tq, Sk // tk)

    return pl.pallas_call(
        _fused_cross_attn_kernel,
        out_shape=jax.ShapeDtypeStruct((B, Sq, D), jnp.float32),
        grid_spec=pltpu.PrefetchScalarGridSpec(
            num_scalar_prefetch=0,
            grid=grid,
            in_specs=[
                pl.BlockSpec((1, tq, D), lambda b, qi, ki: (b, qi, 0)),    # q_in
                pl.BlockSpec((1, tk, D), lambda b, qi, ki: (b, ki, 0)),    # k_in
                pl.BlockSpec((1, tk, D), lambda b, qi, ki: (b, ki, 0)),    # x (-> V)
                pl.BlockSpec((1, tq, tk), lambda b, qi, ki: (b, qi, ki)),  # mask i8
                pl.BlockSpec((D, D), lambda b, qi, ki: (0, 0)),            # Wq^T
                pl.BlockSpec((D, D), lambda b, qi, ki: (0, 0)),            # Wk^T
                pl.BlockSpec((D, D), lambda b, qi, ki: (0, 0)),            # Wv^T
            ],
            out_specs=pl.BlockSpec((1, tq, D), lambda b, qi, ki: (b, qi, 0)),
            scratch_shapes=[
                pltpu.VMEM((tq, D), jnp.bfloat16),  # cached projected Q tile
                pltpu.VMEM((tq, 1), jnp.float32),   # running max
                pltpu.VMEM((tq, 1), jnp.float32),   # running sum
                pltpu.VMEM((tq, D), jnp.float32),   # output accumulator
            ],
        ),
        compiler_params=pltpu.CompilerParams(
            dimension_semantics=("parallel", "parallel", "arbitrary")),
    )(q_bf, k_bf, x_bf, mask_i8, wq_t, wk_t, wv_t)


# ---------------------------------------------------------------------------
# Pure-JAX reference (f32) for correctness.
# ---------------------------------------------------------------------------
def _reference(q_in, k_in, x, wq, wk, wv, tgt_mask):
    q = q_in @ wq.T
    k = k_in @ wk.T
    v = x @ wv.T
    scores = jnp.einsum("bqd,bkd->bqk", q, k)
    scores = jnp.where(tgt_mask == 0.0, -1e9, scores)
    p = jax.nn.softmax(scores, axis=-1)
    return jnp.einsum("bqk,bkd->bqd", p, v)


if __name__ == "__main__":
    B, Sq, Sk, D = 2, 8, 8, 32   # small shapes; d_k = 32

    key = jax.random.PRNGKey(0)
    k1, k2, k3, k4, k5, k6 = jax.random.split(key, 6)

    # Deterministic synthetic parameters (PyTorch Linear weight shape: (d_k, d_k)).
    wq = jax.random.normal(k1, (D, D), jnp.float32) * 0.05
    wk = jax.random.normal(k2, (D, D), jnp.float32) * 0.05
    wv = jax.random.normal(k3, (D, D), jnp.float32) * 0.05

    # Inputs: x feeds V; enc_output['q'] / enc_output['k'] feed Q / K.
    x_in = jax.random.normal(k4, (B, Sk, D), jnp.float32)
    enc_q = jax.random.normal(k5, (B, Sq, D), jnp.float32)
    enc_k = jax.random.normal(k6, (B, Sk, D), jnp.float32)

    # Causal-style target mask (1 = keep, 0 = masked).
    tril = jnp.tril(jnp.ones((Sq, Sk), jnp.float32))
    tgt_mask = jnp.broadcast_to(tril, (B, Sq, Sk))

    out = cross_attention(enc_q, enc_k, x_in, wq, wk, wv, tgt_mask)
    out = jax.block_until_ready(out)

    ref = _reference(enc_q, enc_k, x_in, wq, wk, wv, tgt_mask)
    assert out.shape == (B, Sq, D)
    # bf16 matmuls with f32 accumulation -> loosened tolerance vs the f32 reference.
    assert jnp.allclose(out, ref, atol=2e-2, rtol=2e-2), (
        f"max abs err {jnp.max(jnp.abs(out - ref))}")

    print("KERNEL_OK")
</pallas_src>

<mosaic_0001>
module attributes {stable_mosaic.version = 11 : i64} {
  func.func @_fused_cross_attn_kernel(%arg0: i32, %arg1: i32, %arg2: i32, %arg3: memref<1x8x32xbf16, #tpu.memory_space<vmem>>, %arg4: memref<1x8x32xbf16, #tpu.memory_space<vmem>>, %arg5: memref<1x8x32xbf16, #tpu.memory_space<vmem>>, %arg6: memref<1x8x8xi8, #tpu.memory_space<vmem>>, %arg7: memref<32x32xbf16, #tpu.memory_space<vmem>>, %arg8: memref<32x32xbf16, #tpu.memory_space<vmem>>, %arg9: memref<32x32xbf16, #tpu.memory_space<vmem>>, %arg10: memref<1x8x32xf32, #tpu.memory_space<vmem>>, %arg11: memref<8x32xbf16, #tpu.memory_space<vmem>>, %arg12: memref<8x1xf32, #tpu.memory_space<vmem>>, %arg13: memref<8x1xf32, #tpu.memory_space<vmem>>, %arg14: memref<8x32xf32, #tpu.memory_space<vmem>>) attributes {dimension_semantics = [#tpu.dimension_semantics<parallel>, #tpu.dimension_semantics<parallel>, #tpu.dimension_semantics<arbitrary>], iteration_bounds = array<i64: 2, 1, 1>, scalar_prefetch = 0 : i64, scratch_operands = 4 : i64, tpu.core_type = #tpu.core_type<tc>, window_params = [{transform_indices = @transform_0, window_bounds = array<i64: 1, 8, 32>}, {transform_indices = @transform_1, window_bounds = array<i64: 1, 8, 32>}, {transform_indices = @transform_2, window_bounds = array<i64: 1, 8, 32>}, {transform_indices = @transform_3, window_bounds = array<i64: 1, 8, 8>}, {pipeline_mode = #tpu.pipeline_mode<synchronous>, transform_indices = @transform_4, window_bounds = array<i64: 32, 32>}, {pipeline_mode = #tpu.pipeline_mode<synchronous>, transform_indices = @transform_5, window_bounds = array<i64: 32, 32>}, {pipeline_mode = #tpu.pipeline_mode<synchronous>, transform_indices = @transform_6, window_bounds = array<i64: 32, 32>}, {transform_indices = @transform_7, window_bounds = array<i64: 1, 8, 32>}]} {
    %c0_i32 = arith.constant 0 : i32
    %0 = arith.cmpi eq, %arg2, %c0_i32 : i32
    %1 = arith.extui %0 : i1 to i32
    %c0_i32_0 = arith.constant 0 : i32
    %2 = arith.cmpi ne, %1, %c0_i32_0 : i32
    scf.if %2 {
      %c0_35 = arith.constant 0 : index
      %c0_36 = arith.constant 0 : index
      %c0_37 = arith.constant 0 : index
      %47 = vector.load %arg3[%c0_35, %c0_36, %c0_37] : memref<1x8x32xbf16, #tpu.memory_space<vmem>>, vector<1x8x32xbf16>
      %48 = vector.shape_cast %47 : vector<1x8x32xbf16> to vector<8x32xbf16>
      %c0_38 = arith.constant 0 : index
      %c0_39 = arith.constant 0 : index
      %49 = vector.load %arg7[%c0_38, %c0_39] : memref<32x32xbf16, #tpu.memory_space<vmem>>, vector<32x32xbf16>
      %cst_40 = arith.constant dense<0.000000e+00> : vector<8x32xf32>
      %50 = tpu.matmul %48, %49, %cst_40 {dimension_numbers = #tpu.dot_dimension_numbers<[1], [0], [0], [1], [0, 0, 1, 1], [], []>} : vector<8x32xbf16>, vector<32x32xbf16>, vector<8x32xf32> -> vector<8x32xf32>
      %51 = arith.truncf %50 : vector<8x32xf32> to vector<8x32xbf16>
      %c0_41 = arith.constant 0 : index
      %c0_42 = arith.constant 0 : index
      %52 = vector.load %arg11[%c0_41, %c0_42] : memref<8x32xbf16, #tpu.memory_space<vmem>>, vector<8x32xbf16>
      tpu.vector_store %arg11[%c0_41, %c0_42], %51 {strides = array<i32>} : memref<8x32xbf16, #tpu.memory_space<vmem>>, vector<8x32xbf16>,
      %cst_43 = arith.constant 0xFF800000 : f32
      %53 = vector.broadcast %cst_43 : f32 to vector<8x1xf32>
      %c0_44 = arith.constant 0 : index
      %c0_45 = arith.constant 0 : index
      %54 = vector.load %arg12[%c0_44, %c0_45] : memref<8x1xf32, #tpu.memory_space<vmem>>, vector<8x1xf32>
      tpu.vector_store %arg12[%c0_44, %c0_45], %53 {strides = array<i32>} : memref<8x1xf32, #tpu.memory_space<vmem>>, vector<8x1xf32>,
      %cst_46 = arith.constant 0.000000e+00 : f32
      %55 = vector.broadcast %cst_46 : f32 to vector<8x1xf32>
      %c0_47 = arith.constant 0 : index
      %c0_48 = arith.constant 0 : index
      %56 = vector.load %arg13[%c0_47, %c0_48] : memref<8x1xf32, #tpu.memory_space<vmem>>, vector<8x1xf32>
      tpu.vector_store %arg13[%c0_47, %c0_48], %55 {strides = array<i32>} : memref<8x1xf32, #tpu.memory_space<vmem>>, vector<8x1xf32>,
      %cst_49 = arith.constant 0.000000e+00 : f32
      %57 = vector.broadcast %cst_49 : f32 to vector<8x32xf32>
      %c0_50 = arith.constant 0 : index
      %c0_51 = arith.constant 0 : index
      %58 = vector.load %arg14[%c0_50, %c0_51] : memref<8x32xf32, #tpu.memory_space<vmem>>, vector<8x32xf32>
      tpu.vector_store %arg14[%c0_50, %c0_51], %57 {strides = array<i32>} : memref<8x32xf32, #tpu.memory_space<vmem>>, vector<8x32xf32>,
    } else {
    }
    %c0 = arith.constant 0 : index
    %c0_1 = arith.constant 0 : index
    %c0_2 = arith.constant 0 : index
    %3 = vector.load %arg4[%c0, %c0_1, %c0_2] : memref<1x8x32xbf16, #tpu.memory_space<vmem>>, vector<1x8x32xbf16>
    %4 = vector.shape_cast %3 : vector<1x8x32xbf16> to vector<8x32xbf16>
    %c0_3 = arith.constant 0 : index
    %c0_4 = arith.constant 0 : index
    %5 = vector.load %arg8[%c0_3, %c0_4] : memref<32x32xbf16, #tpu.memory_space<vmem>>, vector<32x32xbf16>
    %cst = arith.constant dense<0.000000e+00> : vector<8x32xf32>
    %6 = tpu.matmul %4, %5, %cst {dimension_numbers = #tpu.dot_dimension_numbers<[1], [0], [0], [1], [0, 0, 1, 1], [], []>} : vector<8x32xbf16>, vector<32x32xbf16>, vector<8x32xf32> -> vector<8x32xf32>
    %7 = arith.truncf %6 : vector<8x32xf32> to vector<8x32xbf16>
    %c0_5 = arith.constant 0 : index
    %c0_6 = arith.constant 0 : index
    %c0_7 = arith.constant 0 : index
    %8 = vector.load %arg5[%c0_5, %c0_6, %c0_7] : memref<1x8x32xbf16, #tpu.memory_space<vmem>>, vector<1x8x32xbf16>
    %9 = vector.shape_cast %8 : vector<1x8x32xbf16> to vector<8x32xbf16>
    %c0_8 = arith.constant 0 : index
    %c0_9 = arith.constant 0 : index
    %10 = vector.load %arg9[%c0_8, %c0_9] : memref<32x32xbf16, #tpu.memory_space<vmem>>, vector<32x32xbf16>
    %cst_10 = arith.constant dense<0.000000e+00> : vector<8x32xf32>
    %11 = tpu.matmul %9, %10, %cst_10 {dimension_numbers = #tpu.dot_dimension_numbers<[1], [0], [0], [1], [0, 0, 1, 1], [], []>} : vector<8x32xbf16>, vector<32x32xbf16>, vector<8x32xf32> -> vector<8x32xf32>
    %12 = arith.truncf %11 : vector<8x32xf32> to vector<8x32xbf16>
    %c0_11 = arith.constant 0 : index
    %c0_12 = arith.constant 0 : index
    %c0_13 = arith.constant 0 : index
    %13 = vector.load %arg6[%c0_11, %c0_12, %c0_13] : memref<1x8x8xi8, #tpu.memory_space<vmem>>, vector<1x8x8xi8>
    %14 = vector.shape_cast %13 : vector<1x8x8xi8> to vector<8x8xi8>
    %c0_i8 = arith.constant 0 : i8
    %15 = vector.broadcast %c0_i8 : i8 to vector<8x8xi8>
    %16 = arith.cmpi ne, %14, %15 : vector<8x8xi8>
    %c0_14 = arith.constant 0 : index
    %c0_15 = arith.constant 0 : index
    %17 = vector.load %arg11[%c0_14, %c0_15] : memref<8x32xbf16, #tpu.memory_space<vmem>>, vector<8x32xbf16>
    %cst_16 = arith.constant dense<0.000000e+00> : vector<8x8xf32>
    %18 = tpu.matmul %17, %7, %cst_16 {dimension_numbers = #tpu.dot_dimension_numbers<[1], [1], [0], [0], [0, 0, 1, 0], [], []>} : vector<8x32xbf16>, vector<8x32xbf16>, vector<8x8xf32> -> vector<8x8xf32>
    %cst_17 = arith.constant -1.000000e+09 : f32
    %19 = vector.broadcast %cst_17 : f32 to vector<8x8xf32>
    %20 = arith.select %16, %18, %19 : vector<8x8xi1>, vector<8x8xf32>
    %c0_18 = arith.constant 0 : index
    %c0_19 = arith.constant 0 : index
    %21 = vector.load %arg12[%c0_18, %c0_19] : memref<8x1xf32, #tpu.memory_space<vmem>>, vector<8x1xf32>
    %cst_20 = arith.constant dense<0xFF800000> : vector<8xf32>
    %22 = vector.multi_reduction <maximumf>, %20, %cst_20 [1] : vector<8x8xf32> to vector<8xf32>
    %23 = vector.shape_cast %22 : vector<8xf32> to vector<8x1xf32>
    %24 = arith.maximumf %21, %23 : vector<8x1xf32>
    %25 = arith.subf %21, %24 : vector<8x1xf32>
    %26 = math.exp %25 : vector<8x1xf32>
    %27 = vector.broadcast %24 : vector<8x1xf32> to vector<8x8xf32>
    %28 = arith.subf %20, %27 : vector<8x8xf32>
    %29 = math.exp %28 : vector<8x8xf32>
    %c0_21 = arith.constant 0 : index
    %c0_22 = arith.constant 0 : index
    %30 = vector.load %arg13[%c0_21, %c0_22] : memref<8x1xf32, #tpu.memory_space<vmem>>, vector<8x1xf32>
    %31 = arith.mulf %26, %30 : vector<8x1xf32>
    %cst_23 = arith.constant dense<0.000000e+00> : vector<8xf32>
    %32 = vector.multi_reduction <add>, %29, %cst_23 [1] : vector<8x8xf32> to vector<8xf32>
    %33 = vector.shape_cast %32 : vector<8xf32> to vector<8x1xf32>
    %34 = arith.addf %31, %33 : vector<8x1xf32>
    %c0_24 = arith.constant 0 : index
    %c0_25 = arith.constant 0 : index
    %35 = vector.load %arg13[%c0_24, %c0_25] : memref<8x1xf32, #tpu.memory_space<vmem>>, vector<8x1xf32>
    tpu.vector_store %arg13[%c0_24, %c0_25], %34 {strides = array<i32>} : memref<8x1xf32, #tpu.memory_space<vmem>>, vector<8x1xf32>,
    %c0_26 = arith.constant 0 : index
    %c0_27 = arith.constant 0 : index
    %36 = vector.load %arg14[%c0_26, %c0_27] : memref<8x32xf32, #tpu.memory_space<vmem>>, vector<8x32xf32>
    %37 = vector.broadcast %26 : vector<8x1xf32> to vector<8x32xf32>
    %38 = arith.mulf %37, %36 : vector<8x32xf32>
    %39 = arith.truncf %29 : vector<8x8xf32> to vector<8x8xbf16>
    %cst_28 = arith.constant dense<0.000000e+00> : vector<8x32xf32>
    %40 = tpu.matmul %39, %12, %cst_28 {dimension_numbers = #tpu.dot_dimension_numbers<[1], [0], [0], [1], [0, 0, 1, 1], [], []>} : vector<8x8xbf16>, vector<8x32xbf16>, vector<8x32xf32> -> vector<8x32xf32>
    %41 = arith.addf %38, %40 : vector<8x32xf32>
    %c0_29 = arith.constant 0 : index
    %c0_30 = arith.constant 0 : index
    %42 = vector.load %arg14[%c0_29, %c0_30] : memref<8x32xf32, #tpu.memory_space<vmem>>, vector<8x32xf32>
    tpu.vector_store %arg14[%c0_29, %c0_30], %41 {strides = array<i32>} : memref<8x32xf32, #tpu.memory_space<vmem>>, vector<8x32xf32>,
    %c0_31 = arith.constant 0 : index
    %c0_32 = arith.constant 0 : index
    %43 = vector.load %arg12[%c0_31, %c0_32] : memref<8x1xf32, #tpu.memory_space<vmem>>, vector<8x1xf32>
    tpu.vector_store %arg12[%c0_31, %c0_32], %24 {strides = array<i32>} : memref<8x1xf32, #tpu.memory_space<vmem>>, vector<8x1xf32>,
    %c0_i32_33 = arith.constant 0 : i32
    %44 = arith.cmpi eq, %arg2, %c0_i32_33 : i32
    %45 = arith.extui %44 : i1 to i32
    %c0_i32_34 = arith.constant 0 : i32
    %46 = arith.cmpi ne, %45, %c0_i32_34 : i32
    scf.if %46 {
      %c0_35 = arith.constant 0 : index
      %c0_36 = arith.constant 0 : index
      %47 = vector.load %arg13[%c0_35, %c0_36] : memref<8x1xf32, #tpu.memory_space<vmem>>, vector<8x1xf32>
      %48 = tpu.reciprocal %47 {approx = true} : vector<8x1xf32> -> vector<8x1xf32>
      %c0_37 = arith.constant 0 : index
      %c0_38 = arith.constant 0 : index
      %49 = vector.load %arg14[%c0_37, %c0_38] : memref<8x32xf32, #tpu.memory_space<vmem>>, vector<8x32xf32>
      %50 = vector.broadcast %48 : vector<8x1xf32> to vector<8x32xf32>
      %51 = arith.mulf %49, %50 : vector<8x32xf32>
      %c0_39 = arith.constant 0 : index
      %c0_40 = arith.constant 0 : index
      %c0_41 = arith.constant 0 : index
      %52 = vector.load %arg10[%c0_39, %c0_40, %c0_41] : memref<1x8x32xf32, #tpu.memory_space<vmem>>, vector<1x8x32xf32>
      %53 = vector.shape_cast %52 : vector<1x8x32xf32> to vector<8x32xf32>
      %54 = vector.shape_cast %51 : vector<8x32xf32> to vector<1x8x32xf32>
      tpu.vector_store %arg10[%c0_39, %c0_40, %c0_41], %54 {strides = array<i32>} : memref<1x8x32xf32, #tpu.memory_space<vmem>>, vector<1x8x32xf32>,
    } else {
    }
    return
  }
  func.func @transform_0(%arg0: i32, %arg1: i32, %arg2: i32) -> (i32, i32, i32) {
    %c0_i32 = arith.constant 0 : i32
    %c0_i32_0 = arith.constant 0 : i32
    return %arg0, %arg1, %c0_i32 : i32, i32, i32
  }
  func.func @transform_1(%arg0: i32, %arg1: i32, %arg2: i32) -> (i32, i32, i32) {
    %c0_i32 = arith.constant 0 : i32
    %c0_i32_0 = arith.constant 0 : i32
    return %arg0, %arg2, %c0_i32 : i32, i32, i32
  }
  func.func @transform_2(%arg0: i32, %arg1: i32, %arg2: i32) -> (i32, i32, i32) {
    %c0_i32 = arith.constant 0 : i32
    %c0_i32_0 = arith.constant 0 : i32
    return %arg0, %arg2, %c0_i32 : i32, i32, i32
  }
  func.func @transform_3(%arg0: i32, %arg1: i32, %arg2: i32) -> (i32, i32, i32) {
    %c0_i32 = arith.constant 0 : i32
    return %arg0, %arg1, %arg2 : i32, i32, i32
  }
  func.func @transform_4(%arg0: i32, %arg1: i32, %arg2: i32) -> (i32, i32) {
    %c0_i32 = arith.constant 0 : i32
    %c0_i32_0 = arith.constant 0 : i32
    %c0_i32_1 = arith.constant 0 : i32
    return %c0_i32, %c0_i32_0 : i32, i32
  }
  func.func @transform_5(%arg0: i32, %arg1: i32, %arg2: i32) -> (i32, i32) {
    %c0_i32 = arith.constant 0 : i32
    %c0_i32_0 = arith.constant 0 : i32
    %c0_i32_1 = arith.constant 0 : i32
    return %c0_i32, %c0_i32_0 : i32, i32
  }
  func.func @transform_6(%arg0: i32, %arg1: i32, %arg2: i32) -> (i32, i32) {
    %c0_i32 = arith.constant 0 : i32
    %c0_i32_0 = arith.constant 0 : i32
    %c0_i32_1 = arith.constant 0 : i32
    return %c0_i32, %c0_i32_0 : i32, i32
  }
  func.func @transform_7(%arg0: i32, %arg1: i32, %arg2: i32) -> (i32, i32, i32) {
    %c0_i32 = arith.constant 0 : i32
    %c0_i32_0 = arith.constant 0 : i32
    return %arg0, %arg1, %c0_i32 : i32, i32, i32
  }
}

</mosaic_0001>

<llo_original>
// kernel: tpu_custom_call.1
$region0: #{tpu_custom_call.1}
  #allocation0 [shape = 'u32[]', space=smem, size = 0x4, offset = 0x4, fixed_abs, tag = 'smem constant byte address 0x4 - core index']
  #allocation1 [shape = 'u32[144,128]{1,0:T(1,128)}', space=vmem, size = 0x12000, scoped, tag = 'internal scratch']
  #allocation2 [shape = 'bf16[8,32]{1,0:T(8,128)(2,1)}', space=vmem, size = 0x800, scoped, tag = 'scratch operand']
  #allocation3 [shape = 'f32[8,1]{1,0:T(8,128)}', space=vmem, size = 0x1000, scoped, tag = 'scratch operand']
  #allocation4 [shape = 'f32[8,1]{1,0:T(8,128)}', space=vmem, size = 0x1000, scoped, tag = 'scratch operand']
  #allocation5 [shape = 'f32[8,32]{1,0:T(8,128)}', space=vmem, size = 0x1000, scoped, tag = 'scratch operand']
  %s0 = inlined_call_operand.hbm [shape: bf16[2,8,32], index: 0, kind: input, shape index: {}]
  %s1 = inlined_call_operand.hbm [shape: bf16[2,8,32], index: 1, kind: input, shape index: {}]
  %s2 = inlined_call_operand.hbm [shape: bf16[2,8,32], index: 2, kind: input, shape index: {}]
  %s3 = inlined_call_operand.hbm [shape: s8[2,8,8], index: 3, kind: input, shape index: {}]
  %s4 = inlined_call_operand.hbm [shape: bf16[32,32], index: 4, kind: input, shape index: {}]
  %s5 = inlined_call_operand.vmem [shape: bf16[32,32], index: 5, kind: input, shape index: {}]
  %s6 = inlined_call_operand.hbm [shape: bf16[32,32], index: 6, kind: input, shape index: {}]
  %s7 = inlined_call_operand.hbm [shape: f32[2,8,32], index: 7, kind: output, shape index: {}]
  %s8 = sld [smem:[#allocation0]]
  $region93: #{tpu_custom_call.1} parent=0
    _
  %s10 = ssub.s32 1, %s8
  %s11 = scalar_select 0, %s10, %s8
  $region1: #{tpu_custom_call.1} parent=0
    #allocation6 [shape = 'u8[4096]{0}', space=vmem, size = 0x1000, scoped, tag = 'input window, operand 0']
    #allocation7 [shape = 's32[2]{0}', space=sflag, size = 0x8, scoped, tag = 'scoped memory for tpu_custom_call.1']
    #allocation8 [shape = 's32[2]{0}', space=sflag, size = 0x8, scoped, tag = 'scoped memory for tpu_custom_call.1']
    #allocation9 [shape = 'u8[4096]{0}', space=vmem, size = 0x1000, scoped, tag = 'input window, operand 1']
    #allocation10 [shape = 's32[2]{0}', space=sflag, size = 0x8, scoped, tag = 'scoped memory for tpu_custom_call.1']
    #allocation11 [shape = 'u8[4096]{0}', space=vmem, size = 0x1000, scoped, tag = 'input window, operand 2']
    #allocation12 [shape = 'u8[2048]{0}', space=vmem, size = 0x800, scoped, tag = 'input window, operand 3']
    #allocation13 [shape = 's32[2]{0}', space=sflag, size = 0x8, scoped, tag = 'scoped memory for tpu_custom_call.1']
    #allocation14 [shape = 'u8[8192]{0}', space=vmem, size = 0x2000, scoped, tag = 'input window, operand 4, single buffered']
    #allocation15 [shape = 'u8[8192]{0}', space=vmem, size = 0x2000, scoped, tag = 'input window, operand 6, single buffered']
    #allocation16 [shape = 's32[1]{0}', space=sflag, size = 0x4, scoped, tag = 'scoped memory for tpu_custom_call.1']
    #allocation17 [shape = 'u8[8192]{0}', space=vmem, size = 0x2000, scoped, tag = 'output window, operand 0']
    %12 = vsyncpa [#allocation7], 0
    %s13 = scalar_lea.sflag [#allocation7], 1
    %14 = vsyncpa %s13, 0
    %15 = vsyncpa [#allocation10], 0
    %s16 = scalar_lea.sflag [#allocation10], 1
    %17 = vsyncpa %s16, 0
    %18 = vsyncpa [#allocation13], 0
    %s19 = scalar_lea.sflag [#allocation13], 1
    %20 = vsyncpa %s19, 0
    %21 = vsyncpa [#allocation16], 0
    %22 = vsyncpa [#allocation8], 0
    %s23 = scalar_lea.sflag [#allocation8], 1
    %24 = vsyncpa %s23, 0
    loop: start=0, step=1, limit=4
    $region2: #{tpu_custom_call.1} parent=1 // loop_pre_header
      _
    $region3: #{tpu_custom_call.1} parent=1 // loop_header
      %s26 = sphi 0, %s30
      %p27 = scmp.ge.s32.totalorder %s26, 4
      %s33 = sphi 0, %s52
      %s34 = sphi 0, %s48
      %s35 = sphi 0, %s44
      %s36 = sphi 0, %s33
      %s37 = sphi 0, %s34
      %s38 = sphi 0, %s35
      %s39 = sphi 0, %s36
      %s40 = sphi 0, %s37
      %s41 = sphi 0, %s38
      %s57 = sphi 0, %s59
      %s60 = sphi 0, %s57
      %s61 = sphi 0, %s60
      %s77 = sphi 0, %s61
      %s85 = sphi 0, %s87
      %s88 = sphi 0, %s85
      %s89 = sphi 0, %s88
      %s105 = sphi 0, %s89
      %s113 = sphi 0, %s115
      %s116 = sphi 0, %s113
      %s117 = sphi 0, %s116
      %s133 = sphi 0, %s117
      %s143 = sphi 0, %s145
      %s146 = sphi 0, %s143
      %s147 = sphi 0, %s146
      %s163 = sphi 0, %s147
      %s167 = sphi 0, %s167
      %s169 = sphi 0, %s167
      %s170 = sphi 0, %s169
      %s184 = sphi 0, %s170
      %s188 = sphi 0, %s188
      %s190 = sphi 0, %s188
      %s191 = sphi 0, %s190
      %s205 = sphi 0, %s191
      %s209 = sphi 0, %s209
      %s211 = sphi 0, %s209
      %s212 = sphi 0, %s211
      %s226 = sphi 0, %s212
      %s234 = sphi 0, %s236
      %s237 = sphi 0, %s234
      %s238 = sphi 0, %s237
      %s254 = sphi 0, %s238
    $region4: #{tpu_custom_call.1} parent=1 // loop_header_branch
      %29 = sbr.rel (%p27) target = $region8
    $region5: #{tpu_custom_call.1} parent=1 // loop_body
      %s31 = ssub.s32 %s26, 1
      %s32 = ssub.s32 %s26, 2
      %s42 = sadd.s32 1, %s35
      %p43 = scmp.ge.s32.totalorder %s42, 1
      %s44 = scalar_select %p43, 0, %s42
      %s45 = sadd.s32 1, %s34
      %s46 = scalar_select %p43, %s45, %s34
      %p47 = scmp.ge.s32.totalorder %s46, 1
      %s48 = scalar_select %p47, 0, %s46
      %s49 = sadd.s32 1, %s33
      %s50 = scalar_select %p47, %s49, %s33
      %p51 = scmp.ge.s32.totalorder %s50, 2
      %s52 = scalar_select %p51, 0, %s50
      %s53 = ssub.s32 %s33, %s52
      %s54 = ssub.s32 %s34, %s48
      %s55 = sor.u32 %s53, %s54
      %p56 = scmp.eq.s32.totalorder %s55, 0
      %s58 = sadd.s32 %s57, 1
      %s59 = scalar_select %p56, %s57, %s58
      %p62 = pneg %p56
      %p63 = scmp.eq.s32.totalorder %s26, 1
      %p64 = por %p62, %p63
      %p65 = scmp.ne.s32.totalorder %s57, %s60
      %p66 = scmp.eq.s32.totalorder %s26, 0
      %p67 = por %p65, %p66
      %p68 = scmp.ne.s32.totalorder %s57, %s60
      %p69 = scmp.eq.s32.totalorder %s31, 1
      %p70 = por %p68, %p69
      %p71 = scmp.ne.s32.totalorder %s60, %s61
      %p72 = scmp.eq.s32.totalorder %s31, 0
      %p73 = por %p71, %p72
      %p74 = scmp.ne.s32.totalorder %s60, %s61
      %p75 = scmp.eq.s32.totalorder %s32, 1
      %p76 = por %p74, %p75
      %p78 = scmp.ne.s32.totalorder %s61, %s77
      %p79 = scmp.eq.s32.totalorder %s32, 0
      %p80 = por %p78, %p79
      %s81 = ssub.s32 %s33, %s52
      %s82 = ssub.s32 %s35, %s44
      %s83 = sor.u32 %s81, %s82
      %p84 = scmp.eq.s32.totalorder %s83, 0
      %s86 = sadd.s32 %s85, 1
      %s87 = scalar_select %p84, %s85, %s86
      %p90 = pneg %p84
      %p91 = scmp.eq.s32.totalorder %s26, 1
      %p92 = por %p90, %p91
      %p93 = scmp.ne.s32.totalorder %s85, %s88
      %p94 = scmp.eq.s32.totalorder %s26, 0
      %p95 = por %p93, %p94
      %p96 = scmp.ne.s32.totalorder %s85, %s88
      %p97 = scmp.eq.s32.totalorder %s31, 1
      %p98 = por %p96, %p97
      %p99 = scmp.ne.s32.totalorder %s88, %s89
      %p100 = scmp.eq.s32.totalorder %s31, 0
      %p101 = por %p99, %p100
      %p102 = scmp.ne.s32.totalorder %s88, %s89
      %p103 = scmp.eq.s32.totalorder %s32, 1
      %p104 = por %p102, %p103
      %p106 = scmp.ne.s32.totalorder %s89, %s105
      %p107 = scmp.eq.s32.totalorder %s32, 0
      %p108 = por %p106, %p107
      %s109 = ssub.s32 %s33, %s52
      %s110 = ssub.s32 %s35, %s44
      %s111 = sor.u32 %s109, %s110
      %p112 = scmp.eq.s32.totalorder %s111, 0
      %s114 = sadd.s32 %s113, 1
      %s115 = scalar_select %p112, %s113, %s114
      %p118 = pneg %p112
      %p119 = scmp.eq.s32.totalorder %s26, 1
      %p120 = por %p118, %p119
      %p121 = scmp.ne.s32.totalorder %s113, %s116
      %p122 = scmp.eq.s32.totalorder %s26, 0
      %p123 = por %p121, %p122
      %p124 = scmp.ne.s32.totalorder %s113, %s116
      %p125 = scmp.eq.s32.totalorder %s31, 1
      %p126 = por %p124, %p125
      %p127 = scmp.ne.s32.totalorder %s116, %s117
      %p128 = scmp.eq.s32.totalorder %s31, 0
      %p129 = por %p127, %p128
      %p130 = scmp.ne.s32.totalorder %s116, %s117
      %p131 = scmp.eq.s32.totalorder %s32, 1
      %p132 = por %p130, %p131
      %p134 = scmp.ne.s32.totalorder %s117, %s133
      %p135 = scmp.eq.s32.totalorder %s32, 0
      %p136 = por %p134, %p135
      %s137 = ssub.s32 %s33, %s52
      %s138 = ssub.s32 %s34, %s48
      %s139 = sor.u32 %s137, %s138
      %s140 = ssub.s32 %s35, %s44
      %s141 = sor.u32 %s139, %s140
      %p142 = scmp.eq.s32.totalorder %s141, 0
      %s144 = sadd.s32 %s143, 1
      %s145 = scalar_select %p142, %s143, %s144
      %p148 = pneg %p142
      %p149 = scmp.eq.s32.totalorder %s26, 1
      %p150 = por %p148, %p149
      %p151 = scmp.ne.s32.totalorder %s143, %s146
      %p152 = scmp.eq.s32.totalorder %s26, 0
      %p153 = por %p151, %p152
      %p154 = scmp.ne.s32.totalorder %s143, %s146
      %p155 = scmp.eq.s32.totalorder %s31, 1
      %p156 = por %p154, %p155
      %p157 = scmp.ne.s32.totalorder %s146, %s147
      %p158 = scmp.eq.s32.totalorder %s31, 0
      %p159 = por %p157, %p158
      %p160 = scmp.ne.s32.totalorder %s146, %s147
      %p161 = scmp.eq.s32.totalorder %s32, 1
      %p162 = por %p160, %p161
      %p164 = scmp.ne.s32.totalorder %s147, %s163
      %p165 = scmp.eq.s32.totalorder %s32, 0
      %p166 = por %p164, %p165
      %s168 = sadd.s32 %s167, 1
      %p171 = scmp.eq.s32.totalorder %s26, 1
      %p172 = scmp.ne.s32.totalorder %s167, %s169
      %p173 = scmp.eq.s32.totalorder %s26, 0
      %p174 = por %p172, %p173
      %p175 = scmp.ne.s32.totalorder %s167, %s169
      %p176 = scmp.eq.s32.totalorder %s31, 1
      %p177 = por %p175, %p176
      %p178 = scmp.ne.s32.totalorder %s169, %s170
      %p179 = scmp.eq.s32.totalorder %s31, 0
      %p180 = por %p178, %p179
      %p181 = scmp.ne.s32.totalorder %s169, %s170
      %p182 = scmp.eq.s32.totalorder %s32, 1
      %p183 = por %p181, %p182
      %p185 = scmp.ne.s32.totalorder %s170, %s184
      %p186 = scmp.eq.s32.totalorder %s32, 0
      %p187 = por %p185, %p186
      %s189 = sadd.s32 %s188, 1
      %p192 = scmp.eq.s32.totalorder %s26, 1
      %p193 = scmp.ne.s32.totalorder %s188, %s190
      %p194 = scmp.eq.s32.totalorder %s26, 0
      %p195 = por %p193, %p194
      %p196 = scmp.ne.s32.totalorder %s188, %s190
      %p197 = scmp.eq.s32.totalorder %s31, 1
      %p198 = por %p196, %p197
      %p199 = scmp.ne.s32.totalorder %s190, %s191
      %p200 = scmp.eq.s32.totalorder %s31, 0
      %p201 = por %p199, %p200
      %p202 = scmp.ne.s32.totalorder %s190, %s191
      %p203 = scmp.eq.s32.totalorder %s32, 1
      %p204 = por %p202, %p203
      %p206 = scmp.ne.s32.totalorder %s191, %s205
      %p207 = scmp.eq.s32.totalorder %s32, 0
      %p208 = por %p206, %p207
      %s210 = sadd.s32 %s209, 1
      %p213 = scmp.eq.s32.totalorder %s26, 1
      %p214 = scmp.ne.s32.totalorder %s209, %s211
      %p215 = scmp.eq.s32.totalorder %s26, 0
      %p216 = por %p214, %p215
      %p217 = scmp.ne.s32.totalorder %s209, %s211
      %p218 = scmp.eq.s32.totalorder %s31, 1
      %p219 = por %p217, %p218
      %p220 = scmp.ne.s32.totalorder %s211, %s212
      %p221 = scmp.eq.s32.totalorder %s31, 0
      %p222 = por %p220, %p221
      %p223 = scmp.ne.s32.totalorder %s211, %s212
      %p224 = scmp.eq.s32.totalorder %s32, 1
      %p225 = por %p223, %p224
      %p227 = scmp.ne.s32.totalorder %s212, %s226
      %p228 = scmp.eq.s32.totalorder %s32, 0
      %p229 = por %p227, %p228
      %s230 = ssub.s32 %s33, %s52
      %s231 = ssub.s32 %s34, %s48
      %s232 = sor.u32 %s230, %s231
      %p233 = scmp.eq.s32.totalorder %s232, 0
      %s235 = sadd.s32 %s234, 1
      %s236 = scalar_select %p233, %s234, %s235
      %p239 = pneg %p233
      %p240 = scmp.eq.s32.totalorder %s26, 1
      %p241 = por %p239, %p240
      %p242 = scmp.ne.s32.totalorder %s234, %s237
      %p243 = scmp.eq.s32.totalorder %s26, 0
      %p244 = por %p242, %p243
      %p245 = scmp.ne.s32.totalorder %s234, %s237
      %p246 = scmp.eq.s32.totalorder %s31, 1
      %p247 = por %p245, %p246
      %p248 = scmp.ne.s32.totalorder %s237, %s238
      %p249 = scmp.eq.s32.totalorder %s31, 0
      %p250 = por %p248, %p249
      %p251 = scmp.ne.s32.totalorder %s237, %s238
      %p252 = scmp.eq.s32.totalorder %s32, 1
      %p253 = por %p251, %p252
      %p255 = scmp.ne.s32.totalorder %s238, %s254
      %p256 = scmp.eq.s32.totalorder %s32, 0
      %p257 = por %p255, %p256
      %p258 = scmp.le.s32.totalorder 1, %s26
      %p259 = scmp.lt.s32.totalorder %s26, 3
      %p260 = pnand %p258, %p259
      %p261 = pneg %p260
      // Predicated region
      $region9: #{tpu_custom_call.1} parent=5 // pred_check
        _
      $region10: #{tpu_custom_call.1} parent=5 // pred_check_branch
        %263 = sbr.rel (%p260) target = $region12
      $region11: #{tpu_custom_call.1} parent=5 // pred_region
        %s264 = ssub.s32 %s26, 1
        // Predicated region
        $region13: #{tpu_custom_call.1} parent=11 // pred_check
          %p265 = pneg %p180
        $region14: #{tpu_custom_call.1} parent=11 // pred_check_branch
          %267 = sbr.rel (%p265) target = $region16
        $region15: #{tpu_custom_call.1} parent=11 // pred_region
          %s269 = ssub.s32 256, 256
          %270 = vsyncadd [#allocation13], %s269
          %s271 = sshll.u32 [#allocation14], 4
          %s272 = int_to_ptr.vmem [resolvable:$true] %s271
          %277 = dma.hbm_to_vmem [thread:$0]  %s4, 256, %s272, [#allocation13], 64, 64, 4
        $region16: #{tpu_custom_call.1} parent=11 // pred_fallthru
          _
        // Predicated region
        $region17: #{tpu_custom_call.1} parent=11 // pred_check
          %p278 = pneg %p201
        $region18: #{tpu_custom_call.1} parent=11 // pred_check_branch
          %280 = sbr.rel (%p278) target = $region20
        $region19: #{tpu_custom_call.1} parent=11 // pred_region
          _
        $region20: #{tpu_custom_call.1} parent=11 // pred_fallthru
          _
        // Predicated region
        $region21: #{tpu_custom_call.1} parent=11 // pred_check
          %p281 = pneg %p222
        $region22: #{tpu_custom_call.1} parent=11 // pred_check_branch
          %283 = sbr.rel (%p281) target = $region24
        $region23: #{tpu_custom_call.1} parent=11 // pred_region
          %s285 = ssub.s32 256, 256
          %286 = vsyncadd [#allocation16], %s285
          %s287 = sshll.u32 [#allocation15], 4
          %s288 = int_to_ptr.vmem [resolvable:$true] %s287
          %293 = dma.hbm_to_vmem [thread:$0]  %s6, 256, %s288, [#allocation16], 64, 64, 4
        $region24: #{tpu_custom_call.1} parent=11 // pred_fallthru
          _
      $region12: #{tpu_custom_call.1} parent=5 // pred_fallthru
        _
      %p294 = scmp.lt.s32.totalorder %s26, 2
      // Predicated region
      $region25: #{tpu_custom_call.1} parent=5 // pred_check
        %p295 = pneg %p294
      $region26: #{tpu_custom_call.1} parent=5 // pred_check_branch
        %297 = sbr.rel (%p295) target = $region28
      $region27: #{tpu_custom_call.1} parent=5 // pred_region
        // Predicated region
        $region29: #{tpu_custom_call.1} parent=27 // pred_check
          %p298 = pneg %p67
        $region30: #{tpu_custom_call.1} parent=27 // pred_check_branch
          %300 = sbr.rel (%p298) target = $region32
        $region31: #{tpu_custom_call.1} parent=27 // pred_region
          %s301 = sand.u32 %s57, 1
          %s302 = scalar_lea.sflag [#allocation7], %s301
          %s303 = sand.u32 %s57, 1
          %s304 = smul.addr %s303, 4
          %s305 = scalar_lea.vmem [#allocation6], %s304
          %s307 = ssub.s32 64, 64
          %308 = vsyncadd %s302, %s307
          %s309 = sadd.s32 %s34, %s33
          %s310 = smul.addr %s309, 64
          %s311 = scalar_lea.hbm %s0, %s310
          %s313 = sshll.u32 %s305, 4
          %s314 = int_to_ptr.vmem [resolvable:$true] %s313
          %316 = dma.hbm_to_vmem [thread:$0]  %s311, 64, %s314, %s302
        $region32: #{tpu_custom_call.1} parent=27 // pred_fallthru
          _
        // Predicated region
        $region33: #{tpu_custom_call.1} parent=27 // pred_check
          %p317 = pneg %p95
        $region34: #{tpu_custom_call.1} parent=27 // pred_check_branch
          %319 = sbr.rel (%p317) target = $region36
        $region35: #{tpu_custom_call.1} parent=27 // pred_region
          %s320 = sand.u32 %s26, 1
          %s321 = scalar_lea.sflag [#allocation10], %s320
          %s322 = sand.u32 %s85, 1
          %s323 = smul.addr %s322, 4
          %s324 = scalar_lea.vmem [#allocation9], %s323
          %s326 = ssub.s32 64, 64
          %327 = vsyncadd %s321, %s326
          %s328 = sadd.s32 %s35, %s33
          %s329 = smul.addr %s328, 64
          %s330 = scalar_lea.hbm %s1, %s329
          %s332 = sshll.u32 %s324, 4
          %s333 = int_to_ptr.vmem [resolvable:$true] %s332
          %335 = dma.hbm_to_vmem [thread:$0]  %s330, 64, %s333, %s321
        $region36: #{tpu_custom_call.1} parent=27 // pred_fallthru
          _
        // Predicated region
        $region37: #{tpu_custom_call.1} parent=27 // pred_check
          %p336 = pneg %p123
        $region38: #{tpu_custom_call.1} parent=27 // pred_check_branch
          %338 = sbr.rel (%p336) target = $region40
        $region39: #{tpu_custom_call.1} parent=27 // pred_region
          %s339 = sand.u32 %s26, 1
          %s340 = scalar_lea.sflag [#allocation10], %s339
          %s341 = sand.u32 %s113, 1
          %s342 = smul.addr %s341, 4
          %s343 = scalar_lea.vmem [#allocation11], %s342
          %s345 = ssub.s32 64, 64
          %346 = vsyncadd %s340, %s345
          %s347 = sadd.s32 %s35, %s33
          %s348 = smul.addr %s347, 64
          %s349 = scalar_lea.hbm %s2, %s348
          %s351 = sshll.u32 %s343, 4
          %s352 = int_to_ptr.vmem [resolvable:$true] %s351
          %354 = dma.hbm_to_vmem [thread:$0]  %s349, 64, %s352, %s340
        $region40: #{tpu_custom_call.1} parent=27 // pred_fallthru
          _
        // Predicated region
        $region41: #{tpu_custom_call.1} parent=27 // pred_check
          %p355 = pneg %p153
        $region42: #{tpu_custom_call.1} parent=27 // pred_check_branch
          %357 = sbr.rel (%p355) target = $region44
        $region43: #{tpu_custom_call.1} parent=27 // pred_region
          %s358 = sand.u32 %s26, 1
          %s359 = scalar_lea.sflag [#allocation13], %s358
          %s360 = sand.u32 %s143, 1
          %s361 = smul.addr %s360, 2
          %s362 = scalar_lea.vmem [#allocation12], %s361
          %s364 = ssub.s32 32, 32
          %365 = vsyncadd %s359, %s364
          %s366 = sadd.s32 %s35, %s34
          %s367 = sadd.s32 %s366, %s33
          %s368 = smul.addr %s367, 32
          %s369 = scalar_lea.hbm %s3, %s368
          %s371 = sshll.u32 %s362, 4
          %s372 = int_to_ptr.vmem [resolvable:$true] %s371
          %374 = dma.hbm_to_vmem [thread:$0]  %s369, 32, %s372, %s359
        $region44: #{tpu_custom_call.1} parent=27 // pred_fallthru
          _
      $region28: #{tpu_custom_call.1} parent=5 // pred_fallthru
        _
      %p375 = scmp.le.s32.totalorder 1, %s26
      %p376 = scmp.lt.s32.totalorder %s26, 3
      %p377 = pnand %p375, %p376
      %p378 = pneg %p377
      // Predicated region
      $region45: #{tpu_custom_call.1} parent=5 // pred_check
        _
      $region46: #{tpu_custom_call.1} parent=5 // pred_check_branch
        %380 = sbr.rel (%p377) target = $region48
      $region47: #{tpu_custom_call.1} parent=5 // pred_region
        %s381 = ssub.s32 %s26, 1
        %s382 = sand.u32 %s60, 1
        %s383 = scalar_lea.sflag [#allocation7], %s382
        %s384 = sand.u32 %s60, 1
        %s385 = smul.addr %s384, 4
        %s386 = scalar_lea.vmem [#allocation6], %s385
        // Predicated region
        $region49: #{tpu_custom_call.1} parent=47 // pred_check
          %p387 = pneg %p73
        $region50: #{tpu_custom_call.1} parent=47 // pred_check_branch
          %389 = sbr.rel (%p387) target = $region52
        $region51: #{tpu_custom_call.1} parent=47 // pred_region
          %390 = dma.done %s383, 64
        $region52: #{tpu_custom_call.1} parent=47 // pred_fallthru
          _
        %s391 = sand.u32 %s31, 1
        %s392 = scalar_lea.sflag [#allocation10], %s391
        %s393 = sand.u32 %s88, 1
        %s394 = smul.addr %s393, 4
        %s395 = scalar_lea.vmem [#allocation9], %s394
        // Predicated region
        $region53: #{tpu_custom_call.1} parent=47 // pred_check
          %p396 = pneg %p101
        $region54: #{tpu_custom_call.1} parent=47 // pred_check_branch
          %398 = sbr.rel (%p396) target = $region56
        $region55: #{tpu_custom_call.1} parent=47 // pred_region
          %399 = dma.done %s392, 64
        $region56: #{tpu_custom_call.1} parent=47 // pred_fallthru
          _
        %s400 = sand.u32 %s31, 1
        %s401 = scalar_lea.sflag [#allocation10], %s400
        %s402 = sand.u32 %s116, 1
        %s403 = smul.addr %s402, 4
        %s404 = scalar_lea.vmem [#allocation11], %s403
        // Predicated region
        $region57: #{tpu_custom_call.1} parent=47 // pred_check
          %p405 = pneg %p129
        $region58: #{tpu_custom_call.1} parent=47 // pred_check_branch
          %407 = sbr.rel (%p405) target = $region60
        $region59: #{tpu_custom_call.1} parent=47 // pred_region
          %408 = dma.done %s401, 64
        $region60: #{tpu_custom_call.1} parent=47 // pred_fallthru
          _
        %s409 = sand.u32 %s31, 1
        %s410 = scalar_lea.sflag [#allocation13], %s409
        %s411 = sand.u32 %s146, 1
        %s412 = smul.addr %s411, 2
        %s413 = scalar_lea.vmem [#allocation12], %s412
        // Predicated region
        $region61: #{tpu_custom_call.1} parent=47 // pred_check
          %p414 = pneg %p159
        $region62: #{tpu_custom_call.1} parent=47 // pred_check_branch
          %416 = sbr.rel (%p414) target = $region64
        $region63: #{tpu_custom_call.1} parent=47 // pred_region
          %417 = dma.done %s410, 32
        $region64: #{tpu_custom_call.1} parent=47 // pred_fallthru
          _
        // Predicated region
        $region65: #{tpu_custom_call.1} parent=47 // pred_check
          %p418 = pneg %p180
        $region66: #{tpu_custom_call.1} parent=47 // pred_check_branch
          %420 = sbr.rel (%p418) target = $region68
        $region67: #{tpu_custom_call.1} parent=47 // pred_region
          %421 = dma.done [#allocation13], 256
        $region68: #{tpu_custom_call.1} parent=47 // pred_fallthru
          _
        // Predicated region
        $region69: #{tpu_custom_call.1} parent=47 // pred_check
          %p422 = pneg %p222
        $region70: #{tpu_custom_call.1} parent=47 // pred_check_branch
          %424 = sbr.rel (%p422) target = $region72
        $region71: #{tpu_custom_call.1} parent=47 // pred_region
          %425 = dma.done [#allocation16], 256
        $region72: #{tpu_custom_call.1} parent=47 // pred_fallthru
          _
        %s426 = sand.u32 %s60, 1
        %s427 = scalar_lea.sflag [#allocation7], %s426
        %s428 = sand.u32 %s60, 1
        %s429 = smul.addr %s428, 4
        %s430 = scalar_lea.vmem [#allocation6], %s429
        %p431 = pneg %p73
        %p432 = pneg %p70
        %s433 = sand.u32 %s31, 1
        %s434 = scalar_lea.sflag [#allocation10], %s433
        %s435 = sand.u32 %s88, 1
        %s436 = smul.addr %s435, 4
        %s437 = scalar_lea.vmem [#allocation9], %s436
        %p438 = pneg %p101
        %p439 = pneg %p98
        %s440 = sand.u32 %s31, 1
        %s441 = scalar_lea.sflag [#allocation10], %s440
        %s442 = sand.u32 %s116, 1
        %s443 = smul.addr %s442, 4
        %s444 = scalar_lea.vmem [#allocation11], %s443
        %p445 = pneg %p129
        %p446 = pneg %p126
        %s447 = sand.u32 %s31, 1
        %s448 = scalar_lea.sflag [#allocation13], %s447
        %s449 = sand.u32 %s146, 1
        %s450 = smul.addr %s449, 2
        %s451 = scalar_lea.vmem [#allocation12], %s450
        %p452 = pneg %p159
        %p453 = pneg %p156
        %p454 = pneg %p180
        %p455 = pneg %p177
        %p456 = pneg %p201
        %p457 = pneg %p198
        %p458 = pneg %p222
        %p459 = pneg %p219
        %p460 = pneg %p250
        %p461 = pneg %p247
        %s462 = sand.u32 %s237, 1
        %s463 = scalar_lea.sflag [#allocation8], %s462
        %s464 = sand.u32 %s237, 1
        %s465 = smul.addr %s464, 8
        %s466 = scalar_lea.vmem [#allocation17], %s465
        %p470 = scmp.eq.s32.totalorder %s38, 0
        // Predicated region
        $region73: #{tpu_custom_call.1} parent=47 // pred_check
          %p471 = pneg %p470
        $region74: #{tpu_custom_call.1} parent=47 // pred_check_branch
          %473 = sbr.rel (%p471) target = $region76
        $region75: #{tpu_custom_call.1} parent=47 // pred_region
          %v474 = vld [vmem:[%s386] sm:$0xf]
          %v475 = vld [vmem:[#allocation14] sm:$0xf]
          %v476 = vld [vmem:[#allocation14 + $0x4] sm:$0xf]
          %v477 = vld [vmem:[#allocation14 + $0x8] sm:$0xf]
          %v478 = vld [vmem:[#allocation14 + $0xc] sm:$0xf]
          %v483 = vunpack.c.l.b16 %v475
          %v484 = vunpack.c.l.b16 %v476
          %v485 = vunpack.c.l.b16 %v477
          %v486 = vunpack.c.l.b16 %v478
          %v487 = vpack.c.b16 %v484, %v483
          %v488 = vpack.c.b16 %v486, %v485
          %vm491 = vcmask 261120
          %v493 = vsel %vm491, %v474, 0
          %495 = vmatprep.subr.bf16.mxu0 0
          %496 = vmatpush1.bf16.msra.mxu0 %v487
          %497 = vmatprep.subr.bf16.mxu0 0
          %498 = vmatpush1.bf16.msra.mxu0 %v488
          %499 = vmatprep.subr.bf16.mxu0 0
          %500 = vmatpush1.bf16.msra.mxu0 0
          %501 = vmatprep.subr.bf16.mxu0 0
          %502 = vmatpush1.bf16.msra.mxu0 0
          %503 = vmatprep.subr.bf16.mxu0 0
          %504 = vmatpush1.bf16.msra.mxu0 0
          %505 = vmatprep.subr.bf16.mxu0 0
          %506 = vmatpush1.bf16.msra.mxu0 0
          %507 = vmatprep.subr.bf16.mxu0 0
          %508 = vmatpush1.bf16.msra.mxu0 0
          %509 = vmatprep.subr.bf16.mxu0 0
          %510 = vmatpush1.bf16.msra.mxu0 0
          %511 = vmatprep.subr.bf16.mxu0 0
          %512 = vmatpush1.bf16.msra.mxu0 0
          %513 = vmatprep.subr.bf16.mxu0 0
          %514 = vmatpush1.bf16.msra.mxu0 0
          %515 = vmatprep.subr.bf16.mxu0 0
          %516 = vmatpush1.bf16.msra.mxu0 0
          %517 = vmatprep.subr.bf16.mxu0 0
          %518 = vmatpush1.bf16.msra.mxu0 0
          %519 = vmatprep.subr.bf16.mxu0 0
          %520 = vmatpush1.bf16.msra.mxu0 0
          %521 = vmatprep.subr.bf16.mxu0 0
          %522 = vmatpush1.bf16.msra.mxu0 0
          %523 = vmatprep.subr.bf16.mxu0 0
          %524 = vmatpush1.bf16.msra.mxu0 0
          %525 = vmatprep.subr.bf16.mxu0 0
          %526 = vmatpush1.bf16.msra.mxu0 0
          %527 = vmatprep.mubr.bf16.mxu0 0
          %528 = vmatmul.mubr.bf16.gmra.mrb[0].mxu0 %v493
          %v529 = vpop.f32.mrb[0].mxu0
          %v530 = vadd.f32 0.0, %v529
          %v531 = vpop.f32.mrb[0].mxu0
          %v532 = vpop.f32.mrb[0].mxu0
          %v533 = vpop.f32.mrb[0].mxu0
          %534 = vdwg.mxu0
          %v535 = vpack.c.bf16 %v530, %v530
          %vm536 = vcmask 257024
          %537 = vst.msk [vmem:[#allocation2] sm:$0xf] %vm536, %v535
          %vm538 = vcmask 7168
          %539 = vst.msk [vmem:[#allocation3] sm:$0xff] %vm538, -inf
          %540 = vst.msk [vmem:[#allocation4] sm:$0xff] %vm538, 0.0
          %541 = vst.msk [vmem:[#allocation5] sm:$0xff] %vm491, 0.0
        $region76: #{tpu_custom_call.1} parent=47 // pred_fallthru
          _
        %v542 = vld [vmem:[%s395] sm:$0xf]
        %v543 = vld [vmem:[%s5] sm:$0xf]
        %v544 = vld [vmem:[%s5 + $0x4] sm:$0xf]
        %v545 = vld [vmem:[%s5 + $0x8] sm:$0xf]
        %v546 = vld [vmem:[%s5 + $0xc] sm:$0xf]
        %v551 = vunpack.c.l.b16 %v543
        %v552 = vunpack.c.l.b16 %v544
        %v553 = vunpack.c.l.b16 %v545
        %v554 = vunpack.c.l.b16 %v546
        %v555 = vpack.c.b16 %v552, %v551
        %v556 = vpack.c.b16 %v554, %v553
        %vm559 = vcmask 261120
        %v561 = vsel %vm559, %v542, 0
        %563 = vmatprep.subr.bf16.mxu0 0
        %564 = vmatpush1.bf16.msra.mxu0 %v555
        %565 = vmatprep.subr.bf16.mxu0 0
        %566 = vmatpush1.bf16.msra.mxu0 %v556
        %567 = vmatprep.subr.bf16.mxu0 0
        %568 = vmatpush1.bf16.msra.mxu0 0
        %569 = vmatprep.subr.bf16.mxu0 0
        %570 = vmatpush1.bf16.msra.mxu0 0
        %571 = vmatprep.subr.bf16.mxu0 0
        %572 = vmatpush1.bf16.msra.mxu0 0
        %573 = vmatprep.subr.bf16.mxu0 0
        %574 = vmatpush1.bf16.msra.mxu0 0
        %575 = vmatprep.subr.bf16.mxu0 0
        %576 = vmatpush1.bf16.msra.mxu0 0
        %577 = vmatprep.subr.bf16.mxu0 0
        %578 = vmatpush1.bf16.msra.mxu0 0
        %579 = vmatprep.subr.bf16.mxu0 0
        %580 = vmatpush1.bf16.msra.mxu0 0
        %581 = vmatprep.subr.bf16.mxu0 0
        %582 = vmatpush1.bf16.msra.mxu0 0
        %583 = vmatprep.subr.bf16.mxu0 0
        %584 = vmatpush1.bf16.msra.mxu0 0
        %585 = vmatprep.subr.bf16.mxu0 0
        %586 = vmatpush1.bf16.msra.mxu0 0
        %587 = vmatprep.subr.bf16.mxu0 0
        %588 = vmatpush1.bf16.msra.mxu0 0
        %589 = vmatprep.subr.bf16.mxu0 0
        %590 = vmatpush1.bf16.msra.mxu0 0
        %591 = vmatprep.subr.bf16.mxu0 0
        %592 = vmatpush1.bf16.msra.mxu0 0
        %593 = vmatprep.subr.bf16.mxu0 0
        %594 = vmatpush1.bf16.msra.mxu0 0
        %595 = vmatprep.mubr.bf16.mxu0 0
        %596 = vmatmul.mubr.bf16.gmra.mrb[0].mxu0 %v561
        %v597 = vpop.f32.mrb[0].mxu0
        %v598 = vadd.f32 0.0, %v597
        %v599 = vpop.f32.mrb[0].mxu0
        %v600 = vpop.f32.mrb[0].mxu0
        %v601 = vpop.f32.mrb[0].mxu0
        %602 = vdwg.mxu0
        %v603 = vpack.c.bf16 %v598, %v598
        %v604 = vld [vmem:[%s404] sm:$0xf]
        %v605 = vld [vmem:[#allocation15] sm:$0xf]
        %v606 = vld [vmem:[#allocation15 + $0x4] sm:$0xf]
        %v607 = vld [vmem:[#allocation15 + $0x8] sm:$0xf]
        %v608 = vld [vmem:[#allocation15 + $0xc] sm:$0xf]
        %v613 = vunpack.c.l.b16 %v605
        %v614 = vunpack.c.l.b16 %v606
        %v615 = vunpack.c.l.b16 %v607
        %v616 = vunpack.c.l.b16 %v608
        %v617 = vpack.c.b16 %v614, %v613
        %v618 = vpack.c.b16 %v616, %v615
        %v622 = vsel %vm559, %v604, 0
        %624 = vmatprep.subr.bf16.mxu0 0
        %625 = vmatpush1.bf16.msra.mxu0 %v617
        %626 = vmatprep.subr.bf16.mxu0 0
        %627 = vmatpush1.bf16.msra.mxu0 %v618
        %628 = vmatprep.subr.bf16.mxu0 0
        %629 = vmatpush1.bf16.msra.mxu0 0
        %630 = vmatprep.subr.bf16.mxu0 0
        %631 = vmatpush1.bf16.msra.mxu0 0
        %632 = vmatprep.subr.bf16.mxu0 0
        %633 = vmatpush1.bf16.msra.mxu0 0
        %634 = vmatprep.subr.bf16.mxu0 0
        %635 = vmatpush1.bf16.msra.mxu0 0
        %636 = vmatprep.subr.bf16.mxu0 0
        %637 = vmatpush1.bf16.msra.mxu0 0
        %638 = vmatprep.subr.bf16.mxu0 0
        %639 = vmatpush1.bf16.msra.mxu0 0
        %640 = vmatprep.subr.bf16.mxu0 0
        %641 = vmatpush1.bf16.msra.mxu0 0
        %642 = vmatprep.subr.bf16.mxu0 0
        %643 = vmatpush1.bf16.msra.mxu0 0
        %644 = vmatprep.subr.bf16.mxu0 0
        %645 = vmatpush1.bf16.msra.mxu0 0
        %646 = vmatprep.subr.bf16.mxu0 0
        %647 = vmatpush1.bf16.msra.mxu0 0
        %648 = vmatprep.subr.bf16.mxu0 0
        %649 = vmatpush1.bf16.msra.mxu0 0
        %650 = vmatprep.subr.bf16.mxu0 0
        %651 = vmatpush1.bf16.msra.mxu0 0
        %652 = vmatprep.subr.bf16.mxu0 0
        %653 = vmatpush1.bf16.msra.mxu0 0
        %654 = vmatprep.subr.bf16.mxu0 0
        %655 = vmatpush1.bf16.msra.mxu0 0
        %656 = vmatprep.mubr.bf16.mxu0 0
        %657 = vmatmul.mubr.bf16.gmra.mrb[0].mxu0 %v622
        %v658 = vpop.f32.mrb[0].mxu0
        %v659 = vadd.f32 0.0, %v658
        %v660 = vpop.f32.mrb[0].mxu0
        %v661 = vpop.f32.mrb[0].mxu0
        %v662 = vpop.f32.mrb[0].mxu0
        %663 = vdwg.mxu0
        %v664 = vpack.c.bf16 %v659, %v659
        %v665 = vld [vmem:[%s413] sm:$0x3]
        %vm666 = vnez %v665
        %v667 = vld [vmem:[#allocation2] sm:$0xf]
        %v669 = vsel %vm559, %v667, 0
        %v672 = vsel %vm559, %v603, 0
        %674 = vmatprep.subr.bf16.mxu0 0
        %675 = vmatpush1.bf16.xpose.msra.mxu0 %v672
        %676 = vmatprep.subr.bf16.mxu0 0
        %677 = vmatpush1.bf16.xpose.msra.mxu0 0
        %678 = vmatprep.subr.bf16.mxu0 0
        %679 = vmatpush1.bf16.xpose.msra.mxu0 0
        %680 = vmatprep.subr.bf16.mxu0 0
        %681 = vmatpush1.bf16.xpose.msra.mxu0 0
        %682 = vmatprep.subr.bf16.mxu0 0
        %683 = vmatpush1.bf16.xpose.msra.mxu0 0
        %684 = vmatprep.subr.bf16.mxu0 0
        %685 = vmatpush1.bf16.xpose.msra.mxu0 0
        %686 = vmatprep.subr.bf16.mxu0 0
        %687 = vmatpush1.bf16.xpose.msra.mxu0 0
        %688 = vmatprep.subr.bf16.mxu0 0
        %689 = vmatpush1.bf16.xpose.msra.mxu0 0
        %690 = vmatprep.subr.bf16.mxu0 0
        %691 = vmatpush1.bf16.xpose.msra.mxu0 0
        %692 = vmatprep.subr.bf16.mxu0 0
        %693 = vmatpush1.bf16.xpose.msra.mxu0 0
        %694 = vmatprep.subr.bf16.mxu0 0
        %695 = vmatpush1.bf16.xpose.msra.mxu0 0
        %696 = vmatprep.subr.bf16.mxu0 0
        %697 = vmatpush1.bf16.xpose.msra.mxu0 0
        %698 = vmatprep.subr.bf16.mxu0 0
        %699 = vmatpush1.bf16.xpose.msra.mxu0 0
        %700 = vmatprep.subr.bf16.mxu0 0
        %701 = vmatpush1.bf16.xpose.msra.mxu0 0
        %702 = vmatprep.subr.bf16.mxu0 0
        %703 = vmatpush1.bf16.xpose.msra.mxu0 0
        %704 = vmatprep.subr.bf16.mxu0 0
        %705 = vmatpush1.bf16.xpose.msra.mxu0 0
        %706 = vmatprep.mubr.bf16.mxu0 0
        %707 = vmatmul.mubr.bf16.gmra.mrb[0].mxu0 %v669
        %v708 = vpop.f32.mrb[0].mxu0
        %v709 = vadd.f32 0.0, %v708
        %v710 = vpop.f32.mrb[0].mxu0
        %v711 = vpop.f32.mrb[0].mxu0
        %v712 = vpop.f32.mrb[0].mxu0
        %713 = vdwg.mxu0
        %v714 = vsel %vm666, 16843009, 0
        %v715 = vunpack.c.0.s8 %v714
        %vm716 = vcmp.ne.s32.totalorder %v715, 0
        %v717 = vsel %vm716, %v709, -1e+09
        %v718 = vld [vmem:[#allocation3] sm:$0xff]
        %vm719 = vcmask 64512
        %v720 = vsel %vm719, %v717, -inf
        %721 = vmax.xlane.f32.xlu0 %v720
        %v722 = vpop.xlane.xlu0 %721
        %v723 = vmax.f32 %v718, %v722
        %v724 = vsub.f32 %v718, %v723
        %v725 = vmul.f32 %v724, 1.442695
        %v726 = vpow.pop %v725
        %728 = vset.pattern.permute.xlu0 0
        %729 = vperm.xlu0 %728, %v723
        %v730 = vpop.permute.xlu0 %729
        %v732 = vsub.f32 %v717, %v730
        %v733 = vmul.f32 %v732, 1.442695
        %v734 = vpow.pop %v733
        %v735 = vld [vmem:[#allocation4] sm:$0xff]
        %v736 = vmul.f32 %v726, %v735
        %v737 = vsel %vm719, %v734, 0.0
        %738 = vadd.xlane.f32.xlu0 %v737
        %v739 = vpop.xlane.xlu0 %738
        %v740 = vadd.f32 %v736, %v739
        %vm741 = vcmask 7168
        %742 = vst.msk [vmem:[#allocation4] sm:$0xff] %vm741, %v740
        %v743 = vld [vmem:[#allocation5] sm:$0xff]
        %745 = vset.pattern.permute.xlu0 0
        %746 = vperm.xlu0 %745, %v726
        %v747 = vpop.permute.xlu0 %746
        %v749 = vmul.f32 %v747, %v743
        %v750 = vpack.c.bf16 %v734, %v734
        %v752 = vsel %vm719, %v750, 0
        %vm754 = vcmask 1043456
        %v756 = vsel %vm754, %v664, 0
        %758 = vmatprep.subr.bf16.mxu0 0
        %759 = vmatpush1.bf16.msra.mxu0 %v756
        %760 = vmatprep.subr.bf16.mxu0 0
        %761 = vmatpush1.bf16.msra.mxu0 0
        %762 = vmatprep.subr.bf16.mxu0 0
        %763 = vmatpush1.bf16.msra.mxu0 0
        %764 = vmatprep.subr.bf16.mxu0 0
        %765 = vmatpush1.bf16.msra.mxu0 0
        %766 = vmatprep.subr.bf16.mxu0 0
        %767 = vmatpush1.bf16.msra.mxu0 0
        %768 = vmatprep.subr.bf16.mxu0 0
        %769 = vmatpush1.bf16.msra.mxu0 0
        %770 = vmatprep.subr.bf16.mxu0 0
        %771 = vmatpush1.bf16.msra.mxu0 0
        %772 = vmatprep.subr.bf16.mxu0 0
        %773 = vmatpush1.bf16.msra.mxu0 0
        %774 = vmatprep.subr.bf16.mxu0 0
        %775 = vmatpush1.bf16.msra.mxu0 0
        %776 = vmatprep.subr.bf16.mxu0 0
        %777 = vmatpush1.bf16.msra.mxu0 0
        %778 = vmatprep.subr.bf16.mxu0 0
        %779 = vmatpush1.bf16.msra.mxu0 0
        %780 = vmatprep.subr.bf16.mxu0 0
        %781 = vmatpush1.bf16.msra.mxu0 0
        %782 = vmatprep.subr.bf16.mxu0 0
        %783 = vmatpush1.bf16.msra.mxu0 0
        %784 = vmatprep.subr.bf16.mxu0 0
        %785 = vmatpush1.bf16.msra.mxu0 0
        %786 = vmatprep.subr.bf16.mxu0 0
        %787 = vmatpush1.bf16.msra.mxu0 0
        %788 = vmatprep.subr.bf16.mxu0 0
        %789 = vmatpush1.bf16.msra.mxu0 0
        %790 = vmatprep.mubr.bf16.mxu0 0
        %791 = vmatmul.mubr.bf16.gmra.mrb[0].mxu0 %v752
        %v792 = vpop.f32.mrb[0].mxu0
        %v793 = vadd.f32 0.0, %v792
        %v794 = vpop.f32.mrb[0].mxu0
        %v795 = vpop.f32.mrb[0].mxu0
        %v796 = vpop.f32.mrb[0].mxu0
        %797 = vdwg.mxu0
        %v798 = vadd.f32 %v749, %v793
        %799 = vst.msk [vmem:[#allocation5] sm:$0xff] %vm559, %v798
        %800 = vst.msk [vmem:[#allocation3] sm:$0xff] %vm741, %v723
        // Predicated region
        $region77: #{tpu_custom_call.1} parent=47 // pred_check
          %p801 = pneg %p470
        $region78: #{tpu_custom_call.1} parent=47 // pred_check_branch
          %803 = sbr.rel (%p801) target = $region80
        $region79: #{tpu_custom_call.1} parent=47 // pred_region
          %v804 = vld [vmem:[#allocation4] sm:$0xff]
          %v805 = vrcp.pop %v804
          %v806 = vld [vmem:[#allocation5] sm:$0xff]
          %808 = vset.pattern.permute.xlu0 0
          %809 = vperm.xlu0 %808, %v805
          %v810 = vpop.permute.xlu0 %809
          %v812 = vmul.f32 %v806, %v810
          %813 = vst.msk [vmem:[%s466] sm:$0xff] %vm559, %v812
        $region80: #{tpu_custom_call.1} parent=47 // pred_fallthru
          _
        %s814 = sand.u32 %s237, 1
        %s815 = scalar_lea.sflag [#allocation8], %s814
        %s816 = sand.u32 %s237, 1
        %s817 = smul.addr %s816, 8
        %s818 = scalar_lea.vmem [#allocation17], %s817
        // Predicated region
        $region81: #{tpu_custom_call.1} parent=47 // pred_check
          %p819 = pneg %p247
        $region82: #{tpu_custom_call.1} parent=47 // pred_check_branch
          %821 = sbr.rel (%p819) target = $region84
        $region83: #{tpu_custom_call.1} parent=47 // pred_region
          %s823 = ssub.s32 128, 128
          %824 = vsyncadd %s815, %s823
          %s825 = sadd.s32 %s37, %s36
          %s826 = smul.addr %s825, 128
          %s827 = scalar_lea.hbm %s7, %s826
          %s829 = sshll.u32 %s818, 4
          %s830 = int_to_ptr.vmem [resolvable:$true] %s829
          %832 = dma.vmem_to_hbm [thread:$0]  %s830, 128, %s827, %s815
        $region84: #{tpu_custom_call.1} parent=47 // pred_fallthru
          _
      $region48: #{tpu_custom_call.1} parent=5 // pred_fallthru
        _
      %p833 = scmp.le.s32.totalorder 2, %s26
      // Predicated region
      $region85: #{tpu_custom_call.1} parent=5 // pred_check
        %p834 = pneg %p833
      $region86: #{tpu_custom_call.1} parent=5 // pred_check_branch
        %836 = sbr.rel (%p834) target = $region88
      $region87: #{tpu_custom_call.1} parent=5 // pred_region
        %s837 = ssub.s32 %s26, 2
        // Predicated region
        $region89: #{tpu_custom_call.1} parent=87 // pred_check
          %p838 = pneg %p253
        $region90: #{tpu_custom_call.1} parent=87 // pred_check_branch
          %840 = sbr.rel (%p838) target = $region92
        $region91: #{tpu_custom_call.1} parent=87 // pred_region
          %s841 = sand.u32 %s238, 1
          %s842 = scalar_lea.sflag [#allocation8], %s841
          %s843 = sand.u32 %s238, 1
          %s844 = smul.addr %s843, 8
          %s845 = scalar_lea.vmem [#allocation17], %s844
          %846 = dma.done %s842, 128
        $region92: #{tpu_custom_call.1} parent=87 // pred_fallthru
          _
      $region88: #{tpu_custom_call.1} parent=5 // pred_fallthru
        _
    $region6: #{tpu_custom_call.1} parent=1 // loop_footer
      %s30 = sadd.s32 1, %s26
    $region7: #{tpu_custom_call.1} parent=1 // loop_footer_branch
      %25 = sbr.rel target = $region3
    $region8: #{tpu_custom_call.1} parent=1 // loop_exit
      _
    %847 = vsyncpa [#allocation7], 1
    %s848 = scalar_lea.sflag [#allocation7], 1
    %849 = vsyncpa %s848, 1
    %850 = vsyncpa [#allocation10], 1
    %s851 = scalar_lea.sflag [#allocation10], 1
    %852 = vsyncpa %s851, 1
    %853 = vsyncpa [#allocation13], 1
    %s854 = scalar_lea.sflag [#allocation13], 1
    %855 = vsyncpa %s854, 1
    %856 = vsyncpa [#allocation16], 1
    %857 = vsyncpa [#allocation8], 1
    %s858 = scalar_lea.sflag [#allocation8], 1
    %859 = vsyncpa %s858, 1

</llo_original>
